<compile_context>
chip_gen: v7x
topology: tpu7x:2x2x1
jax: 0.10.0
libtpu: 0.0.40
codegen_flags: <defaults>
</compile_context>

<pallas_src>
import functools

import jax
import jax.numpy as jnp
from jax.experimental import pallas as pl
from jax.experimental.pallas import tpu as pltpu


def _round_up(x, m):
    return (x + m - 1) // m * m


# ----------------------------- Linear kernel ------------------------------

def _linear_kernel(x_ref, w_ref, b_ref, o_ref, *, apply_relu):
    # x: [TN, I], w: [I, O_pad] (pre-transposed), b: [1, O_pad]
    y = jnp.dot(x_ref[...], w_ref[...], preferred_element_type=jnp.float32)
    y = y + b_ref[...]
    if apply_relu:
        y = jnp.maximum(y, 0.0)
    o_ref[...] = y.astype(o_ref.dtype)


def linear(x, w, b, apply_relu=False, block_rows=256):
    """y = x @ w.T + b (PyTorch Linear semantics), tiled over rows.

    x: [N, I], w: [O, I], b: [O].  Weight is pre-transposed and the output dim is
    padded to a multiple of 128 so stores are lane-dense/unmasked.
    """
    N, I = x.shape
    O = w.shape[0]
    O_pad = _round_up(O, 128)

    w_t = jnp.zeros((I, O_pad), x.dtype).at[:, :O].set(w.T)
    b_p = jnp.zeros((1, O_pad), x.dtype).at[0, :O].set(b)

    # Row tile: multiple of 8, no bigger than needed.
    TN = min(block_rows, _round_up(N, 8))
    N_pad = _round_up(N, TN)
    xp = x if N_pad == N else jnp.zeros((N_pad, I), x.dtype).at[:N].set(x)

    out = pl.pallas_call(
        functools.partial(_linear_kernel, apply_relu=apply_relu),
        out_shape=jax.ShapeDtypeStruct((N_pad, O_pad), x.dtype),
        grid=(N_pad // TN,),
        in_specs=[
            pl.BlockSpec((TN, I), lambda i: (i, 0)),
            pl.BlockSpec((I, O_pad), lambda i: (0, 0)),
            pl.BlockSpec((1, O_pad), lambda i: (0, 0)),
        ],
        out_specs=pl.BlockSpec((TN, O_pad), lambda i: (i, 0)),
        compiler_params=pltpu.CompilerParams(
            dimension_semantics=("parallel",)),
    )(xp, w_t, b_p)
    return out[:N, :O]


# ----------------------------- LSTM layer kernel ------------------------------

def _lstm_layer_kernel(x_ref, wih_ref, whh_ref, b_ref, o_ref, h_sc, c_sc, *, H, TC):
    # x_ref:   [TC, B, Hin]   time chunk of inputs
    # wih_ref: [Hin, 4H]      pre-transposed input->hidden weights
    # whh_ref: [H, 4H]        pre-transposed hidden->hidden weights
    # b_ref:   [1, 4H]        combined bias (b_ih + b_hh)
    # o_ref:   [TC, B, H]     time chunk of hidden-state outputs
    # h_sc/c_sc: [B, H]       recurrent state carried across grid steps (VMEM)
    @pl.when(pl.program_id(0) == 0)
    def _():
        h_sc[...] = jnp.zeros_like(h_sc)
        c_sc[...] = jnp.zeros_like(c_sc)

    _, B, Hin = x_ref.shape

    # Hoisted input->gates matmul for the whole chunk: one MXU-friendly matmul,
    # outside the serial recurrence.
    xg = jnp.dot(x_ref[...].reshape(TC * B, Hin), wih_ref[...],
                 preferred_element_type=jnp.float32) + b_ref[...]
    xg = xg.reshape(TC, B, 4 * H)

    whh = whh_ref[...]
    h = h_sc[...]
    c = c_sc[...]

    # Short static loop over the chunk: fully unrolled at trace time, so the
    # slices of xg and the stores to o_ref use constant indices.
    for i in range(TC):
        gates = xg[i] + jnp.dot(h, whh, preferred_element_type=jnp.float32)
        # PyTorch gate order: i, f, g, o.  H is a multiple of 128 -> free views.
        i_g = jax.nn.sigmoid(gates[:, 0 * H:1 * H])
        f_g = jax.nn.sigmoid(gates[:, 1 * H:2 * H])
        g_g = jnp.tanh(gates[:, 2 * H:3 * H])
        o_g = jax.nn.sigmoid(gates[:, 3 * H:4 * H])
        c = f_g * c + i_g * g_g
        h = o_g * jnp.tanh(c)
        o_ref[i] = h.astype(o_ref.dtype)

    h_sc[...] = h
    c_sc[...] = c


def lstm_layer(x, w_ih, w_hh, b_ih, b_hh, time_chunk=8):
    """One unidirectional LSTM layer, zero initial state.

    x: [T, B, Hin] with T % time_chunk == 0 and B % 8 == 0.
    w_ih: [4H, Hin], w_hh: [4H, H] (PyTorch layout; transposed here once).
    """
    T, B, Hin = x.shape
    H = w_hh.shape[1]
    TC = time_chunk
    assert T % TC == 0 and B % 8 == 0

    w_ih_t = jnp.asarray(w_ih.T)                 # [Hin, 4H]
    w_hh_t = jnp.asarray(w_hh.T)                 # [H, 4H]
    b = (b_ih + b_hh).reshape(1, 4 * H)

    return pl.pallas_call(
        functools.partial(_lstm_layer_kernel, H=H, TC=TC),
        out_shape=jax.ShapeDtypeStruct((T, B, H), x.dtype),
        grid=(T // TC,),
        in_specs=[
            pl.BlockSpec((TC, B, Hin), lambda t: (t, 0, 0)),
            pl.BlockSpec((Hin, 4 * H), lambda t: (0, 0)),   # weights stay resident
            pl.BlockSpec((H, 4 * H), lambda t: (0, 0)),
            pl.BlockSpec((1, 4 * H), lambda t: (0, 0)),
        ],
        out_specs=pl.BlockSpec((TC, B, H), lambda t: (t, 0, 0)),
        scratch_shapes=[
            pltpu.VMEM((B, H), jnp.float32),   # h state
            pltpu.VMEM((B, H), jnp.float32),   # c state
        ],
        compiler_params=pltpu.CompilerParams(
            dimension_semantics=("arbitrary",)),   # time is a sequential carry axis
    )(x, w_ih_t, w_hh_t, b)


# ----------------------------- RNN module glue ------------------------------

def init_params(key, input_size, output_size, hidden_size, num_layers):
    keys = jax.random.split(key, 4 + 4 * num_layers)
    s = 1.0 / jnp.sqrt(hidden_size)
    params = {
        "w1": jax.random.uniform(keys[0], (hidden_size, input_size), jnp.float32, -s, s),
        "b1": jax.random.uniform(keys[1], (hidden_size,), jnp.float32, -s, s),
        "w2": jax.random.uniform(keys[2], (output_size, hidden_size), jnp.float32, -s, s),
        "b2": jax.random.uniform(keys[3], (output_size,), jnp.float32, -s, s),
        "lstm": [],
    }
    for l in range(num_layers):
        k = keys[4 + 4 * l: 8 + 4 * l]
        params["lstm"].append(dict(
            w_ih=jax.random.uniform(k[0], (4 * hidden_size, hidden_size), jnp.float32, -s, s),
            w_hh=jax.random.uniform(k[1], (4 * hidden_size, hidden_size), jnp.float32, -s, s),
            b_ih=jax.random.uniform(k[2], (4 * hidden_size,), jnp.float32, -s, s),
            b_hh=jax.random.uniform(k[3], (4 * hidden_size,), jnp.float32, -s, s),
        ))
    return params


def rnn_forward_pallas(xs, params, time_chunk=8):
    """Non-simplified forward: list of [L_i, input_size] -> list of [L_i, output_size]."""
    lengths = [int(x.shape[0]) for x in xs]
    B = len(xs)
    T = max(lengths)
    I = xs[0].shape[1]
    H = params["w1"].shape[0]
    O = params["w2"].shape[0]

    # Pad batch to a sublane multiple and time to a chunk multiple (padded rows/steps
    # are computed on zeros and discarded; unidirectional LSTM => no effect on the
    # first `length` outputs of each sequence).
    B_pad = _round_up(B, 8)
    T_pad = _round_up(T, time_chunk)

    xp = jnp.zeros((T_pad, B_pad, I), jnp.float32)
    for i, x in enumerate(xs):
        xp = xp.at[: x.shape[0], i].set(x)

    # linear1 + ReLU  (dropout=0 -> identity)
    h = linear(xp.reshape(T_pad * B_pad, I), params["w1"], params["b1"], apply_relu=True)
    h = h.reshape(T_pad, B_pad, H)

    # stacked LSTM
    for lp in params["lstm"]:
        h = lstm_layer(h, lp["w_ih"], lp["w_hh"], lp["b_ih"], lp["b_hh"],
                       time_chunk=time_chunk)

    # linear2
    y = linear(h.reshape(T_pad * B_pad, H), params["w2"], params["b2"], apply_relu=False)
    y = y.reshape(T_pad, B_pad, O)

    return [y[:l, i] for i, l in enumerate(lengths)]


def rnn_forward_ref(xs, params):
    """Pure-JAX reference of the same forward (for correctness check)."""
    lengths = [int(x.shape[0]) for x in xs]
    T, B = max(lengths), len(xs)
    I = xs[0].shape[1]
    H = params["w1"].shape[0]

    xp = jnp.zeros((T, B, I), jnp.float32)
    for i, x in enumerate(xs):
        xp = xp.at[: x.shape[0], i].set(x)

    h = jax.nn.relu(xp @ params["w1"].T + params["b1"])
    for lp in params["lstm"]:
        hs = jnp.zeros((B, H), jnp.float32)
        cs = jnp.zeros((B, H), jnp.float32)
        outs = []
        for t in range(T):
            g = h[t] @ lp["w_ih"].T + lp["b_ih"] + hs @ lp["w_hh"].T + lp["b_hh"]
            i_g = jax.nn.sigmoid(g[:, :H])
            f_g = jax.nn.sigmoid(g[:, H:2 * H])
            g_g = jnp.tanh(g[:, 2 * H:3 * H])
            o_g = jax.nn.sigmoid(g[:, 3 * H:])
            cs = f_g * cs + i_g * g_g
            hs = o_g * jnp.tanh(cs)
            outs.append(hs)
        h = jnp.stack(outs)

    y = h @ params["w2"].T + params["b2"]
    return [y[:l, i] for i, l in enumerate(lengths)]


if __name__ == "__main__":
    # H chosen as a lane-tile multiple (128) so gate slices and stores are aligned.
    INPUT, OUTPUT, HIDDEN, NUM_LAYERS = 16, 12, 128, 2
    key = jax.random.PRNGKey(0)
    pkey, k1, k2 = jax.random.split(key, 3)

    params = init_params(pkey, INPUT, OUTPUT, HIDDEN, NUM_LAYERS)

    # batch of 2 variable-length sequences: [10, 16] and [6, 16]
    xs = [
        jax.random.normal(k1, (10, INPUT), jnp.float32),
        jax.random.normal(k2, (6, INPUT), jnp.float32),
    ]

    outs = rnn_forward_pallas(xs, params)
    outs = [jax.block_until_ready(o) for o in outs]

    refs = rnn_forward_ref(xs, params)
    for o, r in zip(outs, refs):
        assert o.shape == r.shape
        assert jnp.allclose(o, r, atol=1e-3, rtol=1e-3)

    print("KERNEL_OK")
</pallas_src>

<mosaic_0001>
module attributes {stable_mosaic.version = 11 : i64} {
  func.func @_linear_kernel(%arg0: i32, %arg1: memref<128x16xf32, #tpu.memory_space<vmem>>, %arg2: memref<16x128xf32, #tpu.memory_space<vmem>>, %arg3: memref<1x128xf32, #tpu.memory_space<vmem>>, %arg4: memref<128x128xf32, #tpu.memory_space<vmem>>) attributes {dimension_semantics = [#tpu.dimension_semantics<parallel>], iteration_bounds = array<i64: 1>, scalar_prefetch = 0 : i64, scratch_operands = 0 : i64, tpu.core_type = #tpu.core_type<tc>, window_params = [{transform_indices = @transform_0, window_bounds = array<i64: 128, 16>}, {pipeline_mode = #tpu.pipeline_mode<synchronous>, transform_indices = @transform_1, window_bounds = array<i64: 16, 128>}, {pipeline_mode = #tpu.pipeline_mode<synchronous>, transform_indices = @transform_2, window_bounds = array<i64: 1, 128>}, {transform_indices = @transform_3, window_bounds = array<i64: 128, 128>}]} {
    %c0 = arith.constant 0 : index
    %c0_0 = arith.constant 0 : index
    %0 = vector.load %arg1[%c0, %c0_0] : memref<128x16xf32, #tpu.memory_space<vmem>>, vector<128x16xf32>
    %c0_1 = arith.constant 0 : index
    %c0_2 = arith.constant 0 : index
    %1 = vector.load %arg2[%c0_1, %c0_2] : memref<16x128xf32, #tpu.memory_space<vmem>>, vector<16x128xf32>
    %cst = arith.constant dense<0.000000e+00> : vector<128x128xf32>
    %2 = tpu.matmul %0, %1, %cst {dimension_numbers = #tpu.dot_dimension_numbers<[1], [0], [0], [1], [0, 0, 1, 1], [], []>} : vector<128x16xf32>, vector<16x128xf32>, vector<128x128xf32> -> vector<128x128xf32>
    %c0_3 = arith.constant 0 : index
    %c0_4 = arith.constant 0 : index
    %3 = vector.load %arg3[%c0_3, %c0_4] : memref<1x128xf32, #tpu.memory_space<vmem>>, vector<1x128xf32>
    %4 = vector.broadcast %3 : vector<1x128xf32> to vector<128x128xf32>
    %5 = arith.addf %2, %4 : vector<128x128xf32>
    %cst_5 = arith.constant 0.000000e+00 : f32
    %6 = vector.broadcast %cst_5 : f32 to vector<128x128xf32>
    %7 = arith.maximumf %5, %6 : vector<128x128xf32>
    %c0_6 = arith.constant 0 : index
    %c0_7 = arith.constant 0 : index
    %8 = vector.load %arg4[%c0_6, %c0_7] : memref<128x128xf32, #tpu.memory_space<vmem>>, vector<128x128xf32>
    tpu.vector_store %arg4[%c0_6, %c0_7], %7 {strides = array<i32>} : memref<128x128xf32, #tpu.memory_space<vmem>>, vector<128x128xf32>,
    return
  }
  func.func @transform_0(%arg0: i32) -> (i32, i32) {
    %c0_i32 = arith.constant 0 : i32
    %c0_i32_0 = arith.constant 0 : i32
    return %arg0, %c0_i32 : i32, i32
  }
  func.func @transform_1(%arg0: i32) -> (i32, i32) {
    %c0_i32 = arith.constant 0 : i32
    %c0_i32_0 = arith.constant 0 : i32
    %c0_i32_1 = arith.constant 0 : i32
    return %c0_i32, %c0_i32_0 : i32, i32
  }
  func.func @transform_2(%arg0: i32) -> (i32, i32) {
    %c0_i32 = arith.constant 0 : i32
    %c0_i32_0 = arith.constant 0 : i32
    %c0_i32_1 = arith.constant 0 : i32
    return %c0_i32, %c0_i32_0 : i32, i32
  }
  func.func @transform_3(%arg0: i32) -> (i32, i32) {
    %c0_i32 = arith.constant 0 : i32
    %c0_i32_0 = arith.constant 0 : i32
    return %arg0, %c0_i32 : i32, i32
  }
}

</mosaic_0001>

<llo_original>
// kernel: tpu_custom_call.1
$region0: #{tpu_custom_call.1}
  #allocation0 [shape = 'u32[]', space=smem, size = 0x4, offset = 0x4, fixed_abs, tag = 'smem constant byte address 0x4 - core index']
  #allocation1 [shape = 'u32[144,128]{1,0:T(1,128)}', space=vmem, size = 0x12000, scoped, tag = 'internal scratch']
  %s0 = inlined_call_operand.vmem [shape: f32[128,16], index: 0, kind: input, shape index: {}]
  %s1 = inlined_call_operand.vmem [shape: f32[16,128], index: 1, kind: input, shape index: {}]
  %s2 = inlined_call_operand.vmem [shape: f32[1,128], index: 2, kind: input, shape index: {}]
  %s3 = inlined_call_operand.hbm [shape: f32[128,128], index: 3, kind: output, shape index: {}]
  %s4 = sld [smem:[#allocation0]]
  $region22: #{tpu_custom_call.1} parent=0
    _
  %s6 = ssub.s32 1, %s4
  %s7 = scalar_select 0, %s6, %s4
  $region1: #{tpu_custom_call.1} parent=0
    #allocation2 [shape = 'u8[65536]{0}', space=vmem, size = 0x10000, scoped, tag = 'output window, operand 0, single buffered']
    #allocation3 [shape = 's32[1]{0}', space=sflag, size = 0x4, scoped, tag = 'scoped memory for tpu_custom_call.1']
    %8 = vsyncpa [#allocation3], 0
    // Predicated region
    $region2: #{tpu_custom_call.1} parent=1 // pred_check
      _
    $region3: #{tpu_custom_call.1} parent=1 // pred_check_branch
      %10 = sbr.rel (0) target = $region5
    $region4: #{tpu_custom_call.1} parent=1 // pred_region
      _
    $region5: #{tpu_custom_call.1} parent=1 // pred_fallthru
      _
    // Predicated region
    $region6: #{tpu_custom_call.1} parent=1 // pred_check
      _
    $region7: #{tpu_custom_call.1} parent=1 // pred_check_branch
      %12 = sbr.rel (0) target = $region9
    $region8: #{tpu_custom_call.1} parent=1 // pred_region
      _
    $region9: #{tpu_custom_call.1} parent=1 // pred_fallthru
      _
    // Predicated region
    $region10: #{tpu_custom_call.1} parent=1 // pred_check
      _
    $region11: #{tpu_custom_call.1} parent=1 // pred_check_branch
      %14 = sbr.rel (0) target = $region13
    $region12: #{tpu_custom_call.1} parent=1 // pred_region
      _
    $region13: #{tpu_custom_call.1} parent=1 // pred_fallthru
      _
    %v15 = vld [vmem:[%s0] sm:$0xff]
    %v16 = vld [vmem:[%s0 + $0x8] sm:$0xff]
    %v17 = vld [vmem:[%s0 + $0x10] sm:$0xff]
    %v18 = vld [vmem:[%s0 + $0x18] sm:$0xff]
    %v19 = vld [vmem:[%s0 + $0x20] sm:$0xff]
    %v20 = vld [vmem:[%s0 + $0x28] sm:$0xff]
    %v21 = vld [vmem:[%s0 + $0x30] sm:$0xff]
    %v22 = vld [vmem:[%s0 + $0x38] sm:$0xff]
    %v23 = vld [vmem:[%s0 + $0x40] sm:$0xff]
    %v24 = vld [vmem:[%s0 + $0x48] sm:$0xff]
    %v25 = vld [vmem:[%s0 + $0x50] sm:$0xff]
    %v26 = vld [vmem:[%s0 + $0x58] sm:$0xff]
    %v27 = vld [vmem:[%s0 + $0x60] sm:$0xff]
    %v28 = vld [vmem:[%s0 + $0x68] sm:$0xff]
    %v29 = vld [vmem:[%s0 + $0x70] sm:$0xff]
    %v30 = vld [vmem:[%s0 + $0x78] sm:$0xff]
    %v31 = vld [vmem:[%s1] sm:$0xff]
    %v32 = vld [vmem:[%s1 + $0x8] sm:$0xff]
    %v33 = vld [vmem:[%s2] sm:$0x1]
    %v35 = vlaneseq
    %v36 = vshrl.u32 %v35, 7
    %v37 = vsub.s32 0, %v36
    %v38 = vrot.slane %v33, %v37
    %vm40 = vcmask 130048
    %v42 = vsel %vm40, %v15, 0
    %v45 = vsel %vm40, %v16, 0
    %v48 = vsel %vm40, %v17, 0
    %v51 = vsel %vm40, %v18, 0
    %v54 = vsel %vm40, %v19, 0
    %v57 = vsel %vm40, %v20, 0
    %v60 = vsel %vm40, %v21, 0
    %v63 = vsel %vm40, %v22, 0
    %v66 = vsel %vm40, %v23, 0
    %v69 = vsel %vm40, %v24, 0
    %v72 = vsel %vm40, %v25, 0
    %v75 = vsel %vm40, %v26, 0
    %v78 = vsel %vm40, %v27, 0
    %v81 = vsel %vm40, %v28, 0
    %v84 = vsel %vm40, %v29, 0
    %v87 = vsel %vm40, %v30, 0
    %89 = vmatprep.subr.mxu0 0.0
    %90 = vmatpush1.msra.mxu0 %v31
    %91 = vmatprep.subr.mxu0 0.0
    %92 = vmatpush1.msra.mxu0 %v32
    %93 = vmatprep.subr.mxu0 0.0
    %94 = vmatpush1.msra.mxu0 0.0
    %95 = vmatprep.subr.mxu0 0.0
    %96 = vmatpush1.msra.mxu0 0.0
    %97 = vmatprep.subr.mxu0 0.0
    %98 = vmatpush1.msra.mxu0 0.0
    %99 = vmatprep.subr.mxu0 0.0
    %100 = vmatpush1.msra.mxu0 0.0
    %101 = vmatprep.subr.mxu0 0.0
    %102 = vmatpush1.msra.mxu0 0.0
    %103 = vmatprep.subr.mxu0 0.0
    %104 = vmatpush1.msra.mxu0 0.0
    %105 = vmatprep.subr.mxu0 0.0
    %106 = vmatpush1.msra.mxu0 0.0
    %107 = vmatprep.subr.mxu0 0.0
    %108 = vmatpush1.msra.mxu0 0.0
    %109 = vmatprep.subr.mxu0 0.0
    %110 = vmatpush1.msra.mxu0 0.0
    %111 = vmatprep.subr.mxu0 0.0
    %112 = vmatpush1.msra.mxu0 0.0
    %113 = vmatprep.subr.mxu0 0.0
    %114 = vmatpush1.msra.mxu0 0.0
    %115 = vmatprep.subr.mxu0 0.0
    %116 = vmatpush1.msra.mxu0 0.0
    %117 = vmatprep.subr.mxu0 0.0
    %118 = vmatpush1.msra.mxu0 0.0
    %119 = vmatprep.subr.mxu0 0.0
    %120 = vmatpush1.msra.mxu0 0.0
    %121 = vmatprep.subr.mxu0 0.0
    %122 = vmatpush1.msra.mxu0 0.0
    %123 = vmatprep.subr.mxu0 0.0
    %124 = vmatpush1.msra.mxu0 0.0
    %125 = vmatprep.subr.mxu0 0.0
    %126 = vmatpush1.msra.mxu0 0.0
    %127 = vmatprep.subr.mxu0 0.0
    %128 = vmatpush1.msra.mxu0 0.0
    %129 = vmatprep.subr.mxu0 0.0
    %130 = vmatpush1.msra.mxu0 0.0
    %131 = vmatprep.subr.mxu0 0.0
    %132 = vmatpush1.msra.mxu0 0.0
    %133 = vmatprep.subr.mxu0 0.0
    %134 = vmatpush1.msra.mxu0 0.0
    %135 = vmatprep.subr.mxu0 0.0
    %136 = vmatpush1.msra.mxu0 0.0
    %137 = vmatprep.subr.mxu0 0.0
    %138 = vmatpush1.msra.mxu0 0.0
    %139 = vmatprep.subr.mxu0 0.0
    %140 = vmatpush1.msra.mxu0 0.0
    %141 = vmatprep.subr.mxu0 0.0
    %142 = vmatpush1.msra.mxu0 0.0
    %143 = vmatprep.subr.mxu0 0.0
    %144 = vmatpush1.msra.mxu0 0.0
    %145 = vmatprep.subr.mxu0 0.0
    %146 = vmatpush1.msra.mxu0 0.0
    %147 = vmatprep.subr.mxu0 0.0
    %148 = vmatpush1.msra.mxu0 0.0
    %149 = vmatprep.subr.mxu0 0.0
    %150 = vmatpush1.msra.mxu0 0.0
    %151 = vmatprep.subr.mxu0 0.0
    %152 = vmatpush1.msra.mxu0 0.0
    %153 = vmatprep.mubr.f32.mxu0 0.0
    %154 = vmatmul.mubr.f32.gmra.mrb[0].mxu0 %v42
    %v155 = vpop.f32.mrb[0].mxu0
    %v156 = vadd.f32 %v38, %v155
    %v157 = vpop.f32.mrb[0].mxu0
    %158 = vmatprep.mubr.f32.mxu0 0.0
    %159 = vmatmul.mubr.f32.gmra.mrb[0].mxu0 %v45
    %v160 = vpop.f32.mrb[0].mxu0
    %v161 = vadd.f32 %v38, %v160
    %v162 = vpop.f32.mrb[0].mxu0
    %163 = vmatprep.mubr.f32.mxu0 0.0
    %164 = vmatmul.mubr.f32.gmra.mrb[0].mxu0 %v48
    %v165 = vpop.f32.mrb[0].mxu0
    %v166 = vadd.f32 %v38, %v165
    %v167 = vpop.f32.mrb[0].mxu0
    %168 = vmatprep.mubr.f32.mxu0 0.0
    %169 = vmatmul.mubr.f32.gmra.mrb[0].mxu0 %v51
    %v170 = vpop.f32.mrb[0].mxu0
    %v171 = vadd.f32 %v38, %v170
    %v172 = vpop.f32.mrb[0].mxu0
    %173 = vmatprep.mubr.f32.mxu0 0.0
    %174 = vmatmul.mubr.f32.gmra.mrb[0].mxu0 %v54
    %v175 = vpop.f32.mrb[0].mxu0
    %v176 = vadd.f32 %v38, %v175
    %v177 = vpop.f32.mrb[0].mxu0
    %178 = vmatprep.mubr.f32.mxu0 0.0
    %179 = vmatmul.mubr.f32.gmra.mrb[0].mxu0 %v57
    %v180 = vpop.f32.mrb[0].mxu0
    %v181 = vadd.f32 %v38, %v180
    %v182 = vpop.f32.mrb[0].mxu0
    %183 = vmatprep.mubr.f32.mxu0 0.0
    %184 = vmatmul.mubr.f32.gmra.mrb[0].mxu0 %v60
    %v185 = vpop.f32.mrb[0].mxu0
    %v186 = vadd.f32 %v38, %v185
    %v187 = vpop.f32.mrb[0].mxu0
    %188 = vmatprep.mubr.f32.mxu0 0.0
    %189 = vmatmul.mubr.f32.gmra.mrb[0].mxu0 %v63
    %v190 = vpop.f32.mrb[0].mxu0
    %v191 = vadd.f32 %v38, %v190
    %v192 = vpop.f32.mrb[0].mxu0
    %193 = vmatprep.mubr.f32.mxu0 0.0
    %194 = vmatmul.mubr.f32.gmra.mrb[0].mxu0 %v66
    %v195 = vpop.f32.mrb[0].mxu0
    %v196 = vadd.f32 %v38, %v195
    %v197 = vpop.f32.mrb[0].mxu0
    %198 = vmatprep.mubr.f32.mxu0 0.0
    %199 = vmatmul.mubr.f32.gmra.mrb[0].mxu0 %v69
    %v200 = vpop.f32.mrb[0].mxu0
    %v201 = vadd.f32 %v38, %v200
    %v202 = vpop.f32.mrb[0].mxu0
    %203 = vmatprep.mubr.f32.mxu0 0.0
    %204 = vmatmul.mubr.f32.gmra.mrb[0].mxu0 %v72
    %v205 = vpop.f32.mrb[0].mxu0
    %v206 = vadd.f32 %v38, %v205
    %v207 = vpop.f32.mrb[0].mxu0
    %208 = vmatprep.mubr.f32.mxu0 0.0
    %209 = vmatmul.mubr.f32.gmra.mrb[0].mxu0 %v75
    %v210 = vpop.f32.mrb[0].mxu0
    %v211 = vadd.f32 %v38, %v210
    %v212 = vpop.f32.mrb[0].mxu0
    %213 = vmatprep.mubr.f32.mxu0 0.0
    %214 = vmatmul.mubr.f32.gmra.mrb[0].mxu0 %v78
    %v215 = vpop.f32.mrb[0].mxu0
    %v216 = vadd.f32 %v38, %v215
    %v217 = vpop.f32.mrb[0].mxu0
    %218 = vmatprep.mubr.f32.mxu0 0.0
    %219 = vmatmul.mubr.f32.gmra.mrb[0].mxu0 %v81
    %v220 = vpop.f32.mrb[0].mxu0
    %v221 = vadd.f32 %v38, %v220
    %v222 = vpop.f32.mrb[0].mxu0
    %223 = vmatprep.mubr.f32.mxu0 0.0
    %224 = vmatmul.mubr.f32.gmra.mrb[0].mxu0 %v84
    %v225 = vpop.f32.mrb[0].mxu0
    %v226 = vadd.f32 %v38, %v225
    %v227 = vpop.f32.mrb[0].mxu0
    %228 = vmatprep.mubr.f32.mxu0 0.0
    %229 = vmatmul.mubr.f32.gmra.mrb[0].mxu0 %v87
    %v230 = vpop.f32.mrb[0].mxu0
    %v231 = vadd.f32 %v38, %v230
    %v232 = vpop.f32.mrb[0].mxu0
    %233 = vdwg.mxu0
    %v234 = vmax.f32 %v156, 0.0
    %v235 = vmax.f32 %v161, 0.0
    %v236 = vmax.f32 %v166, 0.0
    %v237 = vmax.f32 %v171, 0.0
    %v238 = vmax.f32 %v176, 0.0
    %v239 = vmax.f32 %v181, 0.0
    %v240 = vmax.f32 %v186, 0.0
    %v241 = vmax.f32 %v191, 0.0
    %v242 = vmax.f32 %v196, 0.0
    %v243 = vmax.f32 %v201, 0.0
    %v244 = vmax.f32 %v206, 0.0
    %v245 = vmax.f32 %v211, 0.0
    %v246 = vmax.f32 %v216, 0.0
    %v247 = vmax.f32 %v221, 0.0
    %v248 = vmax.f32 %v226, 0.0
    %v249 = vmax.f32 %v231, 0.0
    %250 = vst [vmem:[#allocation2] sm:$0xff] %v234
    %251 = vst [vmem:[#allocation2 + $0x8] sm:$0xff] %v235
    %252 = vst [vmem:[#allocation2 + $0x10] sm:$0xff] %v236
    %253 = vst [vmem:[#allocation2 + $0x18] sm:$0xff] %v237
    %254 = vst [vmem:[#allocation2 + $0x20] sm:$0xff] %v238
    %255 = vst [vmem:[#allocation2 + $0x28] sm:$0xff] %v239
    %256 = vst [vmem:[#allocation2 + $0x30] sm:$0xff] %v240
    %257 = vst [vmem:[#allocation2 + $0x38] sm:$0xff] %v241
    %258 = vst [vmem:[#allocation2 + $0x40] sm:$0xff] %v242
    %259 = vst [vmem:[#allocation2 + $0x48] sm:$0xff] %v243
    %260 = vst [vmem:[#allocation2 + $0x50] sm:$0xff] %v244
    %261 = vst [vmem:[#allocation2 + $0x58] sm:$0xff] %v245
    %262 = vst [vmem:[#allocation2 + $0x60] sm:$0xff] %v246
    %263 = vst [vmem:[#allocation2 + $0x68] sm:$0xff] %v247
    %264 = vst [vmem:[#allocation2 + $0x70] sm:$0xff] %v248
    %265 = vst [vmem:[#allocation2 + $0x78] sm:$0xff] %v249
    // Predicated region
    $region14: #{tpu_custom_call.1} parent=1 // pred_check
      _
    $region15: #{tpu_custom_call.1} parent=1 // pred_check_branch
      %267 = sbr.rel (0) target = $region17
    $region16: #{tpu_custom_call.1} parent=1 // pred_region
      %s269 = ssub.s32 2048, 2048
      %270 = vsyncadd [#allocation3], %s269
      %s271 = sshll.u32 [#allocation2], 4
      %s272 = int_to_ptr.vmem [resolvable:$true] %s271
      %277 = dma.vmem_to_hbm [thread:$0]  %s272, 2048, %s3, [#allocation3], 128, 128, 8
    $region17: #{tpu_custom_call.1} parent=1 // pred_fallthru
      _
    // Predicated region
    $region18: #{tpu_custom_call.1} parent=1 // pred_check
      _
    $region19: #{tpu_custom_call.1} parent=1 // pred_check_branch
      %279 = sbr.rel (0) target = $region21
    $region20: #{tpu_custom_call.1} parent=1 // pred_region
      %280 = dma.done [#allocation3], 2048
    $region21: #{tpu_custom_call.1} parent=1 // pred_fallthru
      _
    %281 = vsyncpa [#allocation3], 1

</llo_original>
